<compile_context>
chip_gen: v7x
topology: tpu7x:2x2x1
jax: 0.10.0
libtpu: 0.0.40
codegen_flags: <defaults>
</compile_context>

<pallas_src>
import functools

import jax
import jax.numpy as jnp
import numpy as np
from jax.experimental import pallas as pl
from jax.experimental.pallas import tpu as pltpu

_NEG = -1e30  # "minus infinity" that stays NaN-free through fp32 arithmetic


def _round_up(x, m):
    return ((x + m - 1) // m) * m


def _regscore_kernel(feat_ref, cls_ref, xbin_ref, wbig_ref, wrest_ref,
                     brest_ref, lanebias_ref, w0_ref, b0_ref, out_ref, *, k: int):
    f32 = jnp.float32
    tb = feat_ref.shape[0]

    # ---- adaptive gating: aggregated scores (mean over H folded into wbig) -----------
    agg = jnp.dot(feat_ref[...], wbig_ref[...], preferred_element_type=f32)
    agg = agg + lanebias_ref[...]                 # (TB, NbinP); padded bins sit at -1e30

    # ---- k-th largest per row (duplicate-aware), O(k * Nbin) instead of O(Nbin^2) ----
    work = agg
    thr = jnp.full((tb, 1), _NEG, f32)
    remaining = jnp.full((tb, 1), float(k), f32)
    for _ in range(k):                             # k is small & static -> unrolled
        cur = jnp.max(work, axis=-1, keepdims=True)
        thr = jnp.where(remaining > 0.0, cur, thr)
        hit = jnp.where(work >= cur, 1.0, 0.0)     # multiplicity of the current max
        remaining = remaining - jnp.sum(hit, axis=-1, keepdims=True)
        work = jnp.where(hit > 0.0, _NEG, work)

    # ---- hard top-k mask (forward value of the straight-through trick) ---------------
    # TODO(synk): training-time soft-mask/STE gradient path needs jax.custom_vjp with a
    #             dedicated backward kernel; the forward value is exactly the hard mask.
    mask = jnp.where(agg >= thr, 1.0, 0.0)
    xb = mask * xbin_ref[...]                      # (TB, NbinP); padded bins are zero

    # ---- emb_to_reg (bias column handled separately -> no offset-1 slices) -----------
    reg_rest = jnp.dot(cls_ref[...], wrest_ref[...],
                       preferred_element_type=f32) + brest_ref[...]        # (TB, NbinP)
    reg_bias = (jnp.sum(cls_ref[...].astype(f32) * w0_ref[...],
                        axis=-1, keepdims=True) + b0_ref[...])             # (TB, 1)

    out = reg_bias + jnp.sum(xb * reg_rest, axis=-1, keepdims=True)
    out_ref[...] = out.astype(out_ref.dtype)


def _prepare_params(params, h, nbin, nbin_pad, matmul_dtype):
    f32 = jnp.float32
    w_bin = jnp.asarray(params["w_bin"], f32)      # (Nbin, F)   binning_map.weight
    w_reg = jnp.asarray(params["w_reg"], f32)      # (1+Nbin, H) emb_to_reg.weight
    b_reg = jnp.asarray(params["b_reg"], f32)      # (1+Nbin,)   emb_to_reg.bias
    pad = nbin_pad - nbin

    # mean-over-H folded into the gating weights: (F*H, NbinP)
    w_big = jnp.repeat(w_bin.T, h, axis=0) / float(h)
    w_big = jnp.pad(w_big, ((0, 0), (0, pad))).astype(matmul_dtype)

    w_rest_t = jnp.pad(w_reg[1:, :].T, ((0, 0), (0, pad))).astype(matmul_dtype)  # (H, NbinP)
    b_rest = jnp.pad(b_reg[1:], (0, pad)).reshape(1, nbin_pad)                   # (1, NbinP)
    lane_bias = jnp.pad(jnp.zeros((nbin,), f32), (0, pad),
                        constant_values=_NEG).reshape(1, nbin_pad)               # (1, NbinP)
    w0 = w_reg[0:1, :]                                                           # (1, H) fp32
    b0 = b_reg[0:1].reshape(1, 1)                                                # (1, 1) fp32
    return w_big, w_rest_t, b_rest, lane_bias, w0, b0


def personalized_regscore(x_t, x_m_emb, x_bin, params, *, k, tau=0.1,
                          matmul_dtype=jnp.bfloat16, batch_tile=None):
    """Forward pass of PersonalizedRegScore (binning_strategy == 'static').

    `tau` is unused in this forward-only kernel (hard top-k mask); kept for API parity.
    # TODO(synk): the registered `bias` buffer (args.median) is unused in forward(); omitted.
    """
    del x_t, tau  # on the static path only the batch size is implied by x_t
    b, nbin = x_bin.shape
    n_tok, h = x_m_emb.shape[1], x_m_emb.shape[2]
    f = n_tok - 1
    if not 1 <= k <= nbin:
        raise ValueError(f"k={k} must satisfy 1 <= k <= bin_features={nbin}")

    f32 = jnp.float32
    nbin_pad = _round_up(nbin, 128)
    tb = batch_tile if batch_tile is not None else min(128, _round_up(b, 8))
    tb = _round_up(tb, 8)
    b_pad = _round_up(b, tb)
    grid = (b_pad // tb,)
    fh = f * h

    # --- layout plumbing in XLA: split cls/features, flatten, pad -----------------------
    cls = x_m_emb[:, 0, :].astype(matmul_dtype)                      # (B, H)
    feat = x_m_emb[:, 1:, :].reshape(b, fh).astype(matmul_dtype)     # (B, F*H)
    xbin = x_bin.astype(f32)
    if b_pad != b:
        cls = jnp.pad(cls, ((0, b_pad - b), (0, 0)))
        feat = jnp.pad(feat, ((0, b_pad - b), (0, 0)))
        xbin = jnp.pad(xbin, ((0, b_pad - b), (0, 0)))
    xbin = jnp.pad(xbin, ((0, 0), (0, nbin_pad - nbin)))

    w_big, w_rest_t, b_rest, lane_bias, w0, b0 = _prepare_params(
        params, h, nbin, nbin_pad, matmul_dtype)

    # VMEM budget: double-buffered activation tiles + resident params + slack.
    itm = jnp.dtype(matmul_dtype).itemsize
    tile_bytes = tb * (fh + h) * itm + tb * nbin_pad * 4 + tb * 4
    param_bytes = (fh + h) * nbin_pad * itm + 2 * nbin_pad * 4 + h * 4 + 4
    vmem_limit = int(min(100 * 2**20,
                         max(16 * 2**20, 4 * tile_bytes + 2 * param_bytes + (4 << 20))))

    kernel = functools.partial(_regscore_kernel, k=k)
    grid_spec = pltpu.PrefetchScalarGridSpec(
        num_scalar_prefetch=0,
        grid=grid,
        in_specs=[
            pl.BlockSpec((tb, fh), lambda i: (i, 0)),         # feature embeddings (flat)
            pl.BlockSpec((tb, h), lambda i: (i, 0)),          # cls token
            pl.BlockSpec((tb, nbin_pad), lambda i: (i, 0)),   # binarized features
            pl.BlockSpec((fh, nbin_pad), lambda i: (0, 0)),   # gating weights (pinned)
            pl.BlockSpec((h, nbin_pad), lambda i: (0, 0)),    # emb_to_reg rest (pinned)
            pl.BlockSpec((1, nbin_pad), lambda i: (0, 0)),    # emb_to_reg rest bias
            pl.BlockSpec((1, nbin_pad), lambda i: (0, 0)),    # lane pad bias (-1e30)
            pl.BlockSpec((1, h), lambda i: (0, 0)),           # emb_to_reg bias-column weight
            pl.BlockSpec((1, 1), lambda i: (0, 0)),           # emb_to_reg bias-column bias
        ],
        out_specs=pl.BlockSpec((tb, 1), lambda i: (i, 0)),
    )

    out_padded = pl.pallas_call(
        kernel,
        out_shape=jax.ShapeDtypeStruct((b_pad, 1), f32),
        grid_spec=grid_spec,
        compiler_params=pltpu.CompilerParams(
            dimension_semantics=("parallel",),
            vmem_limit_bytes=vmem_limit,
        ),
    )(feat, cls, xbin, w_big, w_rest_t, b_rest, lane_bias, w0, b0)

    return out_padded[:b]


def _reference(x_m_emb, x_bin, params, *, k, matmul_dtype):
    """Pure-JAX reference of the module's static-path forward (hard top-k mask).
    Matmul operands are rounded to `matmul_dtype` to mirror the kernel's numerics."""
    f32 = jnp.float32
    b, n_tok, h = x_m_emb.shape
    f = n_tok - 1
    nbin = x_bin.shape[1]

    def rnd(x):
        return x.astype(matmul_dtype).astype(f32)

    w_bin = jnp.asarray(params["w_bin"], f32)
    w_reg = jnp.asarray(params["w_reg"], f32)
    b_reg = jnp.asarray(params["b_reg"], f32)

    w_big = rnd(jnp.repeat(w_bin.T, h, axis=0) / float(h))          # (F*H, Nbin)
    feat = rnd(x_m_emb[:, 1:, :].reshape(b, f * h))
    agg = feat @ w_big                                              # == binning_map(mean(emb))
    thr = jnp.sort(agg, axis=-1)[:, nbin - k][:, None]              # k-th largest per row
    mask = (agg >= thr).astype(f32)
    xb = mask * x_bin.astype(f32)

    cls = rnd(x_m_emb[:, 0, :])
    reg_rest = cls @ rnd(w_reg[1:, :].T) + b_reg[1:][None, :]
    reg_bias = jnp.sum(cls * w_reg[0][None, :], axis=-1, keepdims=True) + b_reg[0]
    return reg_bias + jnp.sum(xb * reg_rest, axis=-1, keepdims=True)


if __name__ == "__main__":
    # Small, module-consistent shapes.
    B = 2
    num_cat, num_con = 2, 3
    F = num_cat + num_con          # features seen by the gating linear
    H = 32                         # multimodal_embedding_dim
    NBIN = 16                      # bin_features_static
    K = 4                          # model_size_m
    TAU = 0.1

    key = jax.random.PRNGKey(0)
    k_emb, k_bin, k_xt, k_wbin, k_wreg, k_breg = jax.random.split(key, 6)

    x_t = jax.random.normal(k_xt, (B, F), dtype=jnp.float32)
    x_m_emb = jax.random.normal(k_emb, (B, 1 + F, H), dtype=jnp.float32)
    x_bin = (jax.random.uniform(k_bin, (B, NBIN)) > 0.5).astype(jnp.float32)

    params = {
        "w_bin": 0.02 * jax.random.normal(k_wbin, (NBIN, F), dtype=jnp.float32),
        "w_reg": 0.02 * jax.random.normal(k_wreg, (1 + NBIN, H), dtype=jnp.float32),
        "b_reg": 0.02 * jax.random.normal(k_breg, (1 + NBIN,), dtype=jnp.float32),
    }

    out = personalized_regscore(x_t, x_m_emb, x_bin, params, k=K, tau=TAU)
    out = jax.block_until_ready(out)

    ref = _reference(x_m_emb, x_bin, params, k=K, matmul_dtype=jnp.bfloat16)
    np.testing.assert_allclose(np.asarray(out), np.asarray(ref), rtol=1e-3, atol=1e-3)
    assert out.shape == (B, 1)

    print("KERNEL_OK")
</pallas_src>

<mosaic_0001>
module attributes {stable_mosaic.version = 11 : i64} {
  func.func @_regscore_kernel(%arg0: i32, %arg1: memref<8x160xbf16, #tpu.memory_space<vmem>>, %arg2: memref<8x32xbf16, #tpu.memory_space<vmem>>, %arg3: memref<8x128xf32, #tpu.memory_space<vmem>>, %arg4: memref<160x128xbf16, #tpu.memory_space<vmem>>, %arg5: memref<32x128xbf16, #tpu.memory_space<vmem>>, %arg6: memref<1x128xf32, #tpu.memory_space<vmem>>, %arg7: memref<1x128xf32, #tpu.memory_space<vmem>>, %arg8: memref<1x32xf32, #tpu.memory_space<vmem>>, %arg9: memref<1x1xf32, #tpu.memory_space<vmem>>, %arg10: memref<8x1xf32, #tpu.memory_space<vmem>>) attributes {dimension_semantics = [#tpu.dimension_semantics<parallel>], iteration_bounds = array<i64: 1>, scalar_prefetch = 0 : i64, scratch_operands = 0 : i64, tpu.core_type = #tpu.core_type<tc>, window_params = [{transform_indices = @transform_0, window_bounds = array<i64: 8, 160>}, {transform_indices = @transform_1, window_bounds = array<i64: 8, 32>}, {transform_indices = @transform_2, window_bounds = array<i64: 8, 128>}, {pipeline_mode = #tpu.pipeline_mode<synchronous>, transform_indices = @transform_3, window_bounds = array<i64: 160, 128>}, {pipeline_mode = #tpu.pipeline_mode<synchronous>, transform_indices = @transform_4, window_bounds = array<i64: 32, 128>}, {pipeline_mode = #tpu.pipeline_mode<synchronous>, transform_indices = @transform_5, window_bounds = array<i64: 1, 128>}, {pipeline_mode = #tpu.pipeline_mode<synchronous>, transform_indices = @transform_6, window_bounds = array<i64: 1, 128>}, {pipeline_mode = #tpu.pipeline_mode<synchronous>, transform_indices = @transform_7, window_bounds = array<i64: 1, 32>}, {pipeline_mode = #tpu.pipeline_mode<synchronous>, transform_indices = @transform_8, window_bounds = array<i64: 1, 1>}, {transform_indices = @transform_9, window_bounds = array<i64: 8, 1>}]} {
    %c0 = arith.constant 0 : index
    %c0_0 = arith.constant 0 : index
    %0 = vector.load %arg1[%c0, %c0_0] : memref<8x160xbf16, #tpu.memory_space<vmem>>, vector<8x160xbf16>
    %c0_1 = arith.constant 0 : index
    %c0_2 = arith.constant 0 : index
    %1 = vector.load %arg4[%c0_1, %c0_2] : memref<160x128xbf16, #tpu.memory_space<vmem>>, vector<160x128xbf16>
    %cst = arith.constant dense<0.000000e+00> : vector<8x128xf32>
    %2 = tpu.matmul %0, %1, %cst {dimension_numbers = #tpu.dot_dimension_numbers<[1], [0], [0], [1], [0, 0, 1, 1], [], []>} : vector<8x160xbf16>, vector<160x128xbf16>, vector<8x128xf32> -> vector<8x128xf32>
    %c0_3 = arith.constant 0 : index
    %c0_4 = arith.constant 0 : index
    %3 = vector.load %arg7[%c0_3, %c0_4] : memref<1x128xf32, #tpu.memory_space<vmem>>, vector<1x128xf32>
    %4 = vector.broadcast %3 : vector<1x128xf32> to vector<8x128xf32>
    %5 = arith.addf %2, %4 : vector<8x128xf32>
    %cst_5 = arith.constant -1.000000e+30 : f32
    %6 = vector.broadcast %cst_5 : f32 to vector<8x1xf32>
    %cst_6 = arith.constant 4.000000e+00 : f32
    %7 = vector.broadcast %cst_6 : f32 to vector<8x1xf32>
    %cst_7 = arith.constant dense<0xFF800000> : vector<8xf32>
    %8 = vector.multi_reduction <maximumf>, %5, %cst_7 [1] : vector<8x128xf32> to vector<8xf32>
    %9 = vector.shape_cast %8 : vector<8xf32> to vector<8x1xf32>
    %cst_8 = arith.constant 0.000000e+00 : f32
    %10 = vector.broadcast %cst_8 : f32 to vector<8x1xf32>
    %11 = arith.cmpf ogt, %7, %10 : vector<8x1xf32>
    %12 = arith.select %11, %9, %6 : vector<8x1xi1>, vector<8x1xf32>
    %13 = vector.broadcast %9 : vector<8x1xf32> to vector<8x128xf32>
    %14 = arith.cmpf oge, %5, %13 : vector<8x128xf32>
    %cst_9 = arith.constant 1.000000e+00 : f32
    %cst_10 = arith.constant 0.000000e+00 : f32
    %15 = vector.broadcast %cst_9 : f32 to vector<8x128xf32>
    %16 = vector.broadcast %cst_10 : f32 to vector<8x128xf32>
    %17 = arith.select %14, %15, %16 : vector<8x128xi1>, vector<8x128xf32>
    %cst_11 = arith.constant dense<0.000000e+00> : vector<8xf32>
    %18 = vector.multi_reduction <add>, %17, %cst_11 [1] : vector<8x128xf32> to vector<8xf32>
    %19 = vector.shape_cast %18 : vector<8xf32> to vector<8x1xf32>
    %20 = arith.subf %7, %19 : vector<8x1xf32>
    %cst_12 = arith.constant 0.000000e+00 : f32
    %21 = vector.broadcast %cst_12 : f32 to vector<8x128xf32>
    %22 = arith.cmpf ogt, %17, %21 : vector<8x128xf32>
    %cst_13 = arith.constant -1.000000e+30 : f32
    %23 = vector.broadcast %cst_13 : f32 to vector<8x128xf32>
    %24 = arith.select %22, %23, %5 : vector<8x128xi1>, vector<8x128xf32>
    %cst_14 = arith.constant dense<0xFF800000> : vector<8xf32>
    %25 = vector.multi_reduction <maximumf>, %24, %cst_14 [1] : vector<8x128xf32> to vector<8xf32>
    %26 = vector.shape_cast %25 : vector<8xf32> to vector<8x1xf32>
    %cst_15 = arith.constant 0.000000e+00 : f32
    %27 = vector.broadcast %cst_15 : f32 to vector<8x1xf32>
    %28 = arith.cmpf ogt, %20, %27 : vector<8x1xf32>
    %29 = arith.select %28, %26, %12 : vector<8x1xi1>, vector<8x1xf32>
    %30 = vector.broadcast %26 : vector<8x1xf32> to vector<8x128xf32>
    %31 = arith.cmpf oge, %24, %30 : vector<8x128xf32>
    %cst_16 = arith.constant 1.000000e+00 : f32
    %cst_17 = arith.constant 0.000000e+00 : f32
    %32 = vector.broadcast %cst_16 : f32 to vector<8x128xf32>
    %33 = vector.broadcast %cst_17 : f32 to vector<8x128xf32>
    %34 = arith.select %31, %32, %33 : vector<8x128xi1>, vector<8x128xf32>
    %cst_18 = arith.constant dense<0.000000e+00> : vector<8xf32>
    %35 = vector.multi_reduction <add>, %34, %cst_18 [1] : vector<8x128xf32> to vector<8xf32>
    %36 = vector.shape_cast %35 : vector<8xf32> to vector<8x1xf32>
    %37 = arith.subf %20, %36 : vector<8x1xf32>
    %cst_19 = arith.constant 0.000000e+00 : f32
    %38 = vector.broadcast %cst_19 : f32 to vector<8x128xf32>
    %39 = arith.cmpf ogt, %34, %38 : vector<8x128xf32>
    %cst_20 = arith.constant -1.000000e+30 : f32
    %40 = vector.broadcast %cst_20 : f32 to vector<8x128xf32>
    %41 = arith.select %39, %40, %24 : vector<8x128xi1>, vector<8x128xf32>
    %cst_21 = arith.constant dense<0xFF800000> : vector<8xf32>
    %42 = vector.multi_reduction <maximumf>, %41, %cst_21 [1] : vector<8x128xf32> to vector<8xf32>
    %43 = vector.shape_cast %42 : vector<8xf32> to vector<8x1xf32>
    %cst_22 = arith.constant 0.000000e+00 : f32
    %44 = vector.broadcast %cst_22 : f32 to vector<8x1xf32>
    %45 = arith.cmpf ogt, %37, %44 : vector<8x1xf32>
    %46 = arith.select %45, %43, %29 : vector<8x1xi1>, vector<8x1xf32>
    %47 = vector.broadcast %43 : vector<8x1xf32> to vector<8x128xf32>
    %48 = arith.cmpf oge, %41, %47 : vector<8x128xf32>
    %cst_23 = arith.constant 1.000000e+00 : f32
    %cst_24 = arith.constant 0.000000e+00 : f32
    %49 = vector.broadcast %cst_23 : f32 to vector<8x128xf32>
    %50 = vector.broadcast %cst_24 : f32 to vector<8x128xf32>
    %51 = arith.select %48, %49, %50 : vector<8x128xi1>, vector<8x128xf32>
    %cst_25 = arith.constant dense<0.000000e+00> : vector<8xf32>
    %52 = vector.multi_reduction <add>, %51, %cst_25 [1] : vector<8x128xf32> to vector<8xf32>
    %53 = vector.shape_cast %52 : vector<8xf32> to vector<8x1xf32>
    %54 = arith.subf %37, %53 : vector<8x1xf32>
    %cst_26 = arith.constant 0.000000e+00 : f32
    %55 = vector.broadcast %cst_26 : f32 to vector<8x128xf32>
    %56 = arith.cmpf ogt, %51, %55 : vector<8x128xf32>
    %cst_27 = arith.constant -1.000000e+30 : f32
    %57 = vector.broadcast %cst_27 : f32 to vector<8x128xf32>
    %58 = arith.select %56, %57, %41 : vector<8x128xi1>, vector<8x128xf32>
    %cst_28 = arith.constant dense<0xFF800000> : vector<8xf32>
    %59 = vector.multi_reduction <maximumf>, %58, %cst_28 [1] : vector<8x128xf32> to vector<8xf32>
    %60 = vector.shape_cast %59 : vector<8xf32> to vector<8x1xf32>
    %cst_29 = arith.constant 0.000000e+00 : f32
    %61 = vector.broadcast %cst_29 : f32 to vector<8x1xf32>
    %62 = arith.cmpf ogt, %54, %61 : vector<8x1xf32>
    %63 = arith.select %62, %60, %46 : vector<8x1xi1>, vector<8x1xf32>
    %64 = vector.broadcast %63 : vector<8x1xf32> to vector<8x128xf32>
    %65 = arith.cmpf oge, %5, %64 : vector<8x128xf32>
    %cst_30 = arith.constant 1.000000e+00 : f32
    %cst_31 = arith.constant 0.000000e+00 : f32
    %66 = vector.broadcast %cst_30 : f32 to vector<8x128xf32>
    %67 = vector.broadcast %cst_31 : f32 to vector<8x128xf32>
    %68 = arith.select %65, %66, %67 : vector<8x128xi1>, vector<8x128xf32>
    %c0_32 = arith.constant 0 : index
    %c0_33 = arith.constant 0 : index
    %69 = vector.load %arg3[%c0_32, %c0_33] : memref<8x128xf32, #tpu.memory_space<vmem>>, vector<8x128xf32>
    %70 = arith.mulf %68, %69 : vector<8x128xf32>
    %c0_34 = arith.constant 0 : index
    %c0_35 = arith.constant 0 : index
    %71 = vector.load %arg2[%c0_34, %c0_35] : memref<8x32xbf16, #tpu.memory_space<vmem>>, vector<8x32xbf16>
    %c0_36 = arith.constant 0 : index
    %c0_37 = arith.constant 0 : index
    %72 = vector.load %arg5[%c0_36, %c0_37] : memref<32x128xbf16, #tpu.memory_space<vmem>>, vector<32x128xbf16>
    %cst_38 = arith.constant dense<0.000000e+00> : vector<8x128xf32>
    %73 = tpu.matmul %71, %72, %cst_38 {dimension_numbers = #tpu.dot_dimension_numbers<[1], [0], [0], [1], [0, 0, 1, 1], [], []>} : vector<8x32xbf16>, vector<32x128xbf16>, vector<8x128xf32> -> vector<8x128xf32>
    %c0_39 = arith.constant 0 : index
    %c0_40 = arith.constant 0 : index
    %74 = vector.load %arg6[%c0_39, %c0_40] : memref<1x128xf32, #tpu.memory_space<vmem>>, vector<1x128xf32>
    %75 = vector.broadcast %74 : vector<1x128xf32> to vector<8x128xf32>
    %76 = arith.addf %73, %75 : vector<8x128xf32>
    %c0_41 = arith.constant 0 : index
    %c0_42 = arith.constant 0 : index
    %77 = vector.load %arg2[%c0_41, %c0_42] : memref<8x32xbf16, #tpu.memory_space<vmem>>, vector<8x32xbf16>
    %78 = arith.extf %77 : vector<8x32xbf16> to vector<8x32xf32>
    %c0_43 = arith.constant 0 : index
    %c0_44 = arith.constant 0 : index
    %79 = vector.load %arg8[%c0_43, %c0_44] : memref<1x32xf32, #tpu.memory_space<vmem>>, vector<1x32xf32>
    %80 = vector.broadcast %79 : vector<1x32xf32> to vector<8x32xf32>
    %81 = arith.mulf %78, %80 : vector<8x32xf32>
    %cst_45 = arith.constant dense<0.000000e+00> : vector<8xf32>
    %82 = vector.multi_reduction <add>, %81, %cst_45 [1] : vector<8x32xf32> to vector<8xf32>
    %83 = vector.shape_cast %82 : vector<8xf32> to vector<8x1xf32>
    %c0_46 = arith.constant 0 : index
    %c0_47 = arith.constant 0 : index
    %84 = vector.load %arg9[%c0_46, %c0_47] : memref<1x1xf32, #tpu.memory_space<vmem>>, vector<1x1xf32>
    %85 = vector.broadcast %84 : vector<1x1xf32> to vector<8x1xf32>
    %86 = arith.addf %83, %85 : vector<8x1xf32>
    %87 = arith.mulf %70, %76 : vector<8x128xf32>
    %cst_48 = arith.constant dense<0.000000e+00> : vector<8xf32>
    %88 = vector.multi_reduction <add>, %87, %cst_48 [1] : vector<8x128xf32> to vector<8xf32>
    %89 = vector.shape_cast %88 : vector<8xf32> to vector<8x1xf32>
    %90 = arith.addf %86, %89 : vector<8x1xf32>
    %c0_49 = arith.constant 0 : index
    %c0_50 = arith.constant 0 : index
    %91 = vector.load %arg10[%c0_49, %c0_50] : memref<8x1xf32, #tpu.memory_space<vmem>>, vector<8x1xf32>
    tpu.vector_store %arg10[%c0_49, %c0_50], %90 {strides = array<i32>} : memref<8x1xf32, #tpu.memory_space<vmem>>, vector<8x1xf32>,
    return
  }
  func.func @transform_0(%arg0: i32) -> (i32, i32) {
    %c0_i32 = arith.constant 0 : i32
    %c0_i32_0 = arith.constant 0 : i32
    return %arg0, %c0_i32 : i32, i32
  }
  func.func @transform_1(%arg0: i32) -> (i32, i32) {
    %c0_i32 = arith.constant 0 : i32
    %c0_i32_0 = arith.constant 0 : i32
    return %arg0, %c0_i32 : i32, i32
  }
  func.func @transform_2(%arg0: i32) -> (i32, i32) {
    %c0_i32 = arith.constant 0 : i32
    %c0_i32_0 = arith.constant 0 : i32
    return %arg0, %c0_i32 : i32, i32
  }
  func.func @transform_3(%arg0: i32) -> (i32, i32) {
    %c0_i32 = arith.constant 0 : i32
    %c0_i32_0 = arith.constant 0 : i32
    %c0_i32_1 = arith.constant 0 : i32
    return %c0_i32, %c0_i32_0 : i32, i32
  }
  func.func @transform_4(%arg0: i32) -> (i32, i32) {
    %c0_i32 = arith.constant 0 : i32
    %c0_i32_0 = arith.constant 0 : i32
    %c0_i32_1 = arith.constant 0 : i32
    return %c0_i32, %c0_i32_0 : i32, i32
  }
  func.func @transform_5(%arg0: i32) -> (i32, i32) {
    %c0_i32 = arith.constant 0 : i32
    %c0_i32_0 = arith.constant 0 : i32
    %c0_i32_1 = arith.constant 0 : i32
    return %c0_i32, %c0_i32_0 : i32, i32
  }
  func.func @transform_6(%arg0: i32) -> (i32, i32) {
    %c0_i32 = arith.constant 0 : i32
    %c0_i32_0 = arith.constant 0 : i32
    %c0_i32_1 = arith.constant 0 : i32
    return %c0_i32, %c0_i32_0 : i32, i32
  }
  func.func @transform_7(%arg0: i32) -> (i32, i32) {
    %c0_i32 = arith.constant 0 : i32
    %c0_i32_0 = arith.constant 0 : i32
    %c0_i32_1 = arith.constant 0 : i32
    return %c0_i32, %c0_i32_0 : i32, i32
  }
  func.func @transform_8(%arg0: i32) -> (i32, i32) {
    %c0_i32 = arith.constant 0 : i32
    %c0_i32_0 = arith.constant 0 : i32
    %c0_i32_1 = arith.constant 0 : i32
    return %c0_i32, %c0_i32_0 : i32, i32
  }
  func.func @transform_9(%arg0: i32) -> (i32, i32) {
    %c0_i32 = arith.constant 0 : i32
    %c0_i32_0 = arith.constant 0 : i32
    return %arg0, %c0_i32 : i32, i32
  }
}

</mosaic_0001>

<llo_original>
// kernel: tpu_custom_call.1
$region0: #{tpu_custom_call.1}
  #allocation0 [shape = 'u32[]', space=smem, size = 0x4, offset = 0x4, fixed_abs, tag = 'smem constant byte address 0x4 - core index']
  #allocation1 [shape = 'u32[144,128]{1,0:T(1,128)}', space=vmem, size = 0x12000, scoped, tag = 'internal scratch']
  #allocation2 [shape = 'f32[1,1]{1,0:T(1,128)S(1)}', space=vmem, size = 0x200, scoped, tag = 'scoped memory for tpu_custom_call.1']
  %s0 = inlined_call_operand.hbm [shape: bf16[8,160], index: 0, kind: input, shape index: {}]
  %s1 = inlined_call_operand.hbm [shape: bf16[8,32], index: 1, kind: input, shape index: {}]
  %s2 = inlined_call_operand.hbm [shape: f32[8,128], index: 2, kind: input, shape index: {}]
  %s3 = inlined_call_operand.hbm [shape: bf16[160,128], index: 3, kind: input, shape index: {}]
  %s4 = inlined_call_operand.vmem [shape: bf16[32,128], index: 4, kind: input, shape index: {}]
  %s5 = inlined_call_operand.vmem [shape: f32[1,128], index: 5, kind: input, shape index: {}]
  %s6 = inlined_call_operand.vmem [shape: f32[1,128], index: 6, kind: input, shape index: {}]
  %s7 = inlined_call_operand.vmem [shape: f32[1,32], index: 7, kind: input, shape index: {}]
  %s8 = inlined_call_operand.<no memory space> [shape: f32[1,1], index: 8, kind: input, shape index: {}]
  %s9 = inlined_call_operand.vmem [shape: f32[8,1], index: 9, kind: output, shape index: {}]
  %s10 = sld [smem:[#allocation0]]
  $region62: #{tpu_custom_call.1} parent=0
    _
  %s12 = ssub.s32 1, %s10
  %s13 = scalar_select 0, %s12, %s10
  %v14 = vstv %s8
  %15 = vst [vmem:[#allocation2] sm:$0x1] %v14
  $region1: #{tpu_custom_call.1} parent=0
    #allocation3 [shape = 'u8[4096]{0}', space=vmem, size = 0x1000, scoped, tag = 'input window, operand 0, single buffered']
    #allocation4 [shape = 's32[1]{0}', space=sflag, size = 0x4, scoped, tag = 'scoped memory for tpu_custom_call.1']
    #allocation5 [shape = 'u8[2048]{0}', space=vmem, size = 0x800, scoped, tag = 'input window, operand 1, single buffered']
    #allocation6 [shape = 's32[1]{0}', space=sflag, size = 0x4, scoped, tag = 'scoped memory for tpu_custom_call.1']
    #allocation7 [shape = 'u8[4096]{0}', space=vmem, size = 0x1000, scoped, tag = 'input window, operand 2, single buffered']
    #allocation8 [shape = 'u8[40960]{0}', space=vmem, size = 0xa000, scoped, tag = 'input window, operand 3, single buffered']
    #allocation9 [shape = 's32[1]{0}', space=sflag, size = 0x4, scoped, tag = 'scoped memory for tpu_custom_call.1']
    %16 = vsyncpa [#allocation4], 0
    %17 = vsyncpa [#allocation6], 0
    %18 = vsyncpa [#allocation9], 0
    // Predicated region
    $region2: #{tpu_custom_call.1} parent=1 // pred_check
      _
    $region3: #{tpu_custom_call.1} parent=1 // pred_check_branch
      %20 = sbr.rel (0) target = $region5
    $region4: #{tpu_custom_call.1} parent=1 // pred_region
      %s22 = ssub.s32 128, 128
      %23 = vsyncadd [#allocation4], %s22
      %s25 = sshll.u32 [#allocation3], 4
      %s26 = int_to_ptr.vmem [resolvable:$true] %s25
      %28 = dma.hbm_to_vmem [thread:$0]  %s0, 128, %s26, [#allocation4]
    $region5: #{tpu_custom_call.1} parent=1 // pred_fallthru
      _
    // Predicated region
    $region6: #{tpu_custom_call.1} parent=1 // pred_check
      _
    $region7: #{tpu_custom_call.1} parent=1 // pred_check_branch
      %30 = sbr.rel (0) target = $region9
    $region8: #{tpu_custom_call.1} parent=1 // pred_region
      %s32 = ssub.s32 64, 64
      %33 = vsyncadd [#allocation6], %s32
      %s35 = sshll.u32 [#allocation5], 4
      %s36 = int_to_ptr.vmem [resolvable:$true] %s35
      %38 = dma.hbm_to_vmem [thread:$0]  %s1, 64, %s36, [#allocation6]
    $region9: #{tpu_custom_call.1} parent=1 // pred_fallthru
      _
    // Predicated region
    $region10: #{tpu_custom_call.1} parent=1 // pred_check
      _
    $region11: #{tpu_custom_call.1} parent=1 // pred_check_branch
      %40 = sbr.rel (0) target = $region13
    $region12: #{tpu_custom_call.1} parent=1 // pred_region
      %s42 = ssub.s32 128, 128
      %43 = vsyncadd [#allocation6], %s42
      %s45 = sshll.u32 [#allocation7], 4
      %s46 = int_to_ptr.vmem [resolvable:$true] %s45
      %48 = dma.hbm_to_vmem [thread:$0]  %s2, 128, %s46, [#allocation6]
    $region13: #{tpu_custom_call.1} parent=1 // pred_fallthru
      _
    // Predicated region
    $region14: #{tpu_custom_call.1} parent=1 // pred_check
      _
    $region15: #{tpu_custom_call.1} parent=1 // pred_check_branch
      %50 = sbr.rel (0) target = $region17
    $region16: #{tpu_custom_call.1} parent=1 // pred_region
      %s52 = ssub.s32 1280, 1280
      %53 = vsyncadd [#allocation9], %s52
      %s54 = sshll.u32 [#allocation8], 4
      %s55 = int_to_ptr.vmem [resolvable:$true] %s54
      %60 = dma.hbm_to_vmem [thread:$0]  %s3, 1280, %s55, [#allocation9], 64, 64, 4
    $region17: #{tpu_custom_call.1} parent=1 // pred_fallthru
      _
    // Predicated region
    $region18: #{tpu_custom_call.1} parent=1 // pred_check
      _
    $region19: #{tpu_custom_call.1} parent=1 // pred_check_branch
      %62 = sbr.rel (0) target = $region21
    $region20: #{tpu_custom_call.1} parent=1 // pred_region
      _
    $region21: #{tpu_custom_call.1} parent=1 // pred_fallthru
      _
    // Predicated region
    $region22: #{tpu_custom_call.1} parent=1 // pred_check
      _
    $region23: #{tpu_custom_call.1} parent=1 // pred_check_branch
      %64 = sbr.rel (0) target = $region25
    $region24: #{tpu_custom_call.1} parent=1 // pred_region
      _
    $region25: #{tpu_custom_call.1} parent=1 // pred_fallthru
      _
    // Predicated region
    $region26: #{tpu_custom_call.1} parent=1 // pred_check
      _
    $region27: #{tpu_custom_call.1} parent=1 // pred_check_branch
      %66 = sbr.rel (0) target = $region29
    $region28: #{tpu_custom_call.1} parent=1 // pred_region
      _
    $region29: #{tpu_custom_call.1} parent=1 // pred_fallthru
      _
    // Predicated region
    $region30: #{tpu_custom_call.1} parent=1 // pred_check
      _
    $region31: #{tpu_custom_call.1} parent=1 // pred_check_branch
      %68 = sbr.rel (0) target = $region33
    $region32: #{tpu_custom_call.1} parent=1 // pred_region
      _
    $region33: #{tpu_custom_call.1} parent=1 // pred_fallthru
      _
    // Predicated region
    $region34: #{tpu_custom_call.1} parent=1 // pred_check
      _
    $region35: #{tpu_custom_call.1} parent=1 // pred_check_branch
      %70 = sbr.rel (0) target = $region37
    $region36: #{tpu_custom_call.1} parent=1 // pred_region
      _
    $region37: #{tpu_custom_call.1} parent=1 // pred_fallthru
      _
    // Predicated region
    $region38: #{tpu_custom_call.1} parent=1 // pred_check
      _
    $region39: #{tpu_custom_call.1} parent=1 // pred_check_branch
      %72 = sbr.rel (0) target = $region41
    $region40: #{tpu_custom_call.1} parent=1 // pred_region
      %73 = dma.done [#allocation4], 128
    $region41: #{tpu_custom_call.1} parent=1 // pred_fallthru
      _
    // Predicated region
    $region42: #{tpu_custom_call.1} parent=1 // pred_check
      _
    $region43: #{tpu_custom_call.1} parent=1 // pred_check_branch
      %75 = sbr.rel (0) target = $region45
    $region44: #{tpu_custom_call.1} parent=1 // pred_region
      %76 = dma.done [#allocation6], 64
    $region45: #{tpu_custom_call.1} parent=1 // pred_fallthru
      _
    // Predicated region
    $region46: #{tpu_custom_call.1} parent=1 // pred_check
      _
    $region47: #{tpu_custom_call.1} parent=1 // pred_check_branch
      %78 = sbr.rel (0) target = $region49
    $region48: #{tpu_custom_call.1} parent=1 // pred_region
      %79 = dma.done [#allocation6], 128
    $region49: #{tpu_custom_call.1} parent=1 // pred_fallthru
      _
    // Predicated region
    $region50: #{tpu_custom_call.1} parent=1 // pred_check
      _
    $region51: #{tpu_custom_call.1} parent=1 // pred_check_branch
      %81 = sbr.rel (0) target = $region53
    $region52: #{tpu_custom_call.1} parent=1 // pred_region
      %82 = dma.done [#allocation9], 1280
    $region53: #{tpu_custom_call.1} parent=1 // pred_fallthru
      _
    %v84 = vld [vmem:[#allocation3] sm:$0xff]
    %v85 = vld [vmem:[#allocation8] sm:$0xf]
    %v86 = vld [vmem:[#allocation8 + $0x4] sm:$0xf]
    %v87 = vld [vmem:[#allocation8 + $0x8] sm:$0xf]
    %v88 = vld [vmem:[#allocation8 + $0xc] sm:$0xf]
    %v89 = vld [vmem:[#allocation8 + $0x10] sm:$0xf]
    %v90 = vld [vmem:[#allocation8 + $0x14] sm:$0xf]
    %v91 = vld [vmem:[#allocation8 + $0x18] sm:$0xf]
    %v92 = vld [vmem:[#allocation8 + $0x1c] sm:$0xf]
    %v93 = vld [vmem:[#allocation8 + $0x20] sm:$0xf]
    %v94 = vld [vmem:[#allocation8 + $0x24] sm:$0xf]
    %v95 = vld [vmem:[#allocation8 + $0x28] sm:$0xf]
    %v96 = vld [vmem:[#allocation8 + $0x2c] sm:$0xf]
    %v97 = vld [vmem:[#allocation8 + $0x30] sm:$0xf]
    %v98 = vld [vmem:[#allocation8 + $0x34] sm:$0xf]
    %v99 = vld [vmem:[#allocation8 + $0x38] sm:$0xf]
    %v100 = vld [vmem:[#allocation8 + $0x3c] sm:$0xf]
    %v101 = vld [vmem:[#allocation8 + $0x40] sm:$0xf]
    %v102 = vld [vmem:[#allocation8 + $0x44] sm:$0xf]
    %v103 = vld [vmem:[#allocation8 + $0x48] sm:$0xf]
    %v104 = vld [vmem:[#allocation8 + $0x4c] sm:$0xf]
    %v105 = vld [vmem:[%s6] sm:$0x1]
    %v107 = vlaneseq
    %v108 = vshrl.u32 %v107, 7
    %v109 = vsub.s32 0, %v108
    %v110 = vrot.slane %v105, %v109
    %v113 = vunpack.c.l.b16 %v84
    %v114 = vunpack.c.h.b16 %v84
    %v115 = vpack.c.b16 %v113, %v113
    %v116 = vpack.c.b16 %v114, %v114
    %v138 = vunpack.c.l.b16 %v85
    %v139 = vunpack.c.l.b16 %v86
    %v140 = vunpack.c.l.b16 %v87
    %v141 = vunpack.c.l.b16 %v88
    %v142 = vunpack.c.l.b16 %v89
    %v143 = vunpack.c.l.b16 %v90
    %v144 = vunpack.c.l.b16 %v91
    %v145 = vunpack.c.l.b16 %v92
    %v146 = vunpack.c.l.b16 %v93
    %v147 = vunpack.c.l.b16 %v94
    %v148 = vunpack.c.l.b16 %v95
    %v149 = vunpack.c.l.b16 %v96
    %v150 = vunpack.c.l.b16 %v97
    %v151 = vunpack.c.l.b16 %v98
    %v152 = vunpack.c.l.b16 %v99
    %v153 = vunpack.c.l.b16 %v100
    %v154 = vunpack.c.l.b16 %v101
    %v155 = vunpack.c.l.b16 %v102
    %v156 = vunpack.c.l.b16 %v103
    %v157 = vunpack.c.l.b16 %v104
    %v158 = vpack.c.b16 %v139, %v138
    %v159 = vpack.c.b16 %v141, %v140
    %v160 = vpack.c.b16 %v143, %v142
    %v161 = vpack.c.b16 %v145, %v144
    %v162 = vpack.c.b16 %v147, %v146
    %v163 = vpack.c.b16 %v149, %v148
    %v164 = vpack.c.b16 %v151, %v150
    %v165 = vpack.c.b16 %v153, %v152
    %v166 = vpack.c.b16 %v155, %v154
    %v167 = vpack.c.b16 %v157, %v156
    %vm178 = vcmask 261120
    %v180 = vsel %vm178, %v116, 0
    %182 = vmatprep.subr.bf16.mxu0 0
    %183 = vmatpush1.bf16.msra.mxu0 %v158
    %184 = vmatprep.subr.bf16.mxu0 0
    %185 = vmatpush1.bf16.msra.mxu0 %v159
    %186 = vmatprep.subr.bf16.mxu0 0
    %187 = vmatpush1.bf16.msra.mxu0 %v160
    %188 = vmatprep.subr.bf16.mxu0 0
    %189 = vmatpush1.bf16.msra.mxu0 %v161
    %190 = vmatprep.subr.bf16.mxu0 0
    %191 = vmatpush1.bf16.msra.mxu0 %v162
    %192 = vmatprep.subr.bf16.mxu0 0
    %193 = vmatpush1.bf16.msra.mxu0 %v163
    %194 = vmatprep.subr.bf16.mxu0 0
    %195 = vmatpush1.bf16.msra.mxu0 %v164
    %196 = vmatprep.subr.bf16.mxu0 0
    %197 = vmatpush1.bf16.msra.mxu0 %v165
    %198 = vmatprep.subr.bf16.mxu0 0
    %199 = vmatpush1.bf16.msra.mxu0 %v166
    %200 = vmatprep.subr.bf16.mxu0 0
    %201 = vmatpush1.bf16.msra.mxu0 %v167
    %202 = vmatprep.subr.bf16.mxu0 0
    %203 = vmatpush1.bf16.msra.mxu0 0
    %204 = vmatprep.subr.bf16.mxu0 0
    %205 = vmatpush1.bf16.msra.mxu0 0
    %206 = vmatprep.subr.bf16.mxu0 0
    %207 = vmatpush1.bf16.msra.mxu0 0
    %208 = vmatprep.subr.bf16.mxu0 0
    %209 = vmatpush1.bf16.msra.mxu0 0
    %210 = vmatprep.subr.bf16.mxu0 0
    %211 = vmatpush1.bf16.msra.mxu0 0
    %212 = vmatprep.subr.bf16.mxu0 0
    %213 = vmatpush1.bf16.msra.mxu0 0
    %214 = vmatprep.mubr.bf16.mxu0 %v180
    %215 = vmatmul.mubr.bf16.gmra.mrb[0].mxu0 %v115
    %v216 = vpop.f32.mrb[0].mxu0
    %v217 = vadd.f32 %v110, %v216
    %v218 = vpop.f32.mrb[0].mxu0
    %v219 = vpop.f32.mrb[0].mxu0
    %v220 = vpop.f32.mrb[0].mxu0
    %221 = vdwg.mxu0
    %222 = vmax.xlane.f32.xlu0 %v217
    %v223 = vpop.xlane.xlu0 %222
    %vm224 = vcmp.gt.f32.partialorder 4.0, 0.0
    %v225 = vsel %vm224, %v223, -1e+30
    %vm226 = vcmp.ge.f32.partialorder %v217, %v223
    %v227 = vsel %vm226, 1.0, 0.0
    %228 = vadd.xlane.f32.xlu0 %v227
    %v229 = vpop.xlane.xlu0 %228
    %v230 = vsub.f32 4.0, %v229
    %vm231 = vcmp.gt.f32.partialorder %v227, 0.0
    %v232 = vsel %vm231, -1e+30, %v217
    %233 = vmax.xlane.f32.xlu0 %v232
    %v234 = vpop.xlane.xlu0 %233
    %vm235 = vcmp.gt.f32.partialorder %v230, 0.0
    %v236 = vsel %vm235, %v234, %v225
    %vm237 = vcmp.ge.f32.partialorder %v232, %v234
    %v238 = vsel %vm237, 1.0, 0.0
    %239 = vadd.xlane.f32.xlu0 %v238
    %v240 = vpop.xlane.xlu0 %239
    %v241 = vsub.f32 %v230, %v240
    %vm242 = vcmp.gt.f32.partialorder %v238, 0.0
    %v243 = vsel %vm242, -1e+30, %v232
    %244 = vmax.xlane.f32.xlu0 %v243
    %v245 = vpop.xlane.xlu0 %244
    %vm246 = vcmp.gt.f32.partialorder %v241, 0.0
    %v247 = vsel %vm246, %v245, %v236
    %vm248 = vcmp.ge.f32.partialorder %v243, %v245
    %v249 = vsel %vm248, 1.0, 0.0
    %250 = vadd.xlane.f32.xlu0 %v249
    %v251 = vpop.xlane.xlu0 %250
    %v252 = vsub.f32 %v241, %v251
    %vm253 = vcmp.gt.f32.partialorder %v249, 0.0
    %v254 = vsel %vm253, -1e+30, %v243
    %255 = vmax.xlane.f32.xlu0 %v254
    %v256 = vpop.xlane.xlu0 %255
    %vm257 = vcmp.gt.f32.partialorder %v252, 0.0
    %v258 = vsel %vm257, %v256, %v247
    %vm259 = vcmp.ge.f32.partialorder %v217, %v258
    %v260 = vsel %vm259, 1.0, 0.0
    %v261 = vld [vmem:[#allocation7] sm:$0xff]
    %v262 = vmul.f32 %v260, %v261
    %v263 = vld [vmem:[#allocation5] sm:$0xf]
    %v264 = vld [vmem:[%s4] sm:$0xf]
    %v265 = vld [vmem:[%s4 + $0x4] sm:$0xf]
    %v266 = vld [vmem:[%s4 + $0x8] sm:$0xf]
    %v267 = vld [vmem:[%s4 + $0xc] sm:$0xf]
    %v268 = vld [vmem:[%s5] sm:$0x1]
    %v270 = vlaneseq
    %v271 = vshrl.u32 %v270, 7
    %v272 = vsub.s32 0, %v271
    %v273 = vrot.slane %v268, %v272
    %v279 = vunpack.c.l.b16 %v264
    %v280 = vunpack.c.l.b16 %v265
    %v281 = vunpack.c.l.b16 %v266
    %v282 = vunpack.c.l.b16 %v267
    %v283 = vpack.c.b16 %v280, %v279
    %v284 = vpack.c.b16 %v282, %v281
    %v288 = vsel %vm178, %v263, 0
    %290 = vmatprep.subr.bf16.mxu0 0
    %291 = vmatpush1.bf16.msra.mxu0 %v283
    %292 = vmatprep.subr.bf16.mxu0 0
    %293 = vmatpush1.bf16.msra.mxu0 %v284
    %294 = vmatprep.subr.bf16.mxu0 0
    %295 = vmatpush1.bf16.msra.mxu0 0
    %296 = vmatprep.subr.bf16.mxu0 0
    %297 = vmatpush1.bf16.msra.mxu0 0
    %298 = vmatprep.subr.bf16.mxu0 0
    %299 = vmatpush1.bf16.msra.mxu0 0
    %300 = vmatprep.subr.bf16.mxu0 0
    %301 = vmatpush1.bf16.msra.mxu0 0
    %302 = vmatprep.subr.bf16.mxu0 0
    %303 = vmatpush1.bf16.msra.mxu0 0
    %304 = vmatprep.subr.bf16.mxu0 0
    %305 = vmatpush1.bf16.msra.mxu0 0
    %306 = vmatprep.subr.bf16.mxu0 0
    %307 = vmatpush1.bf16.msra.mxu0 0
    %308 = vmatprep.subr.bf16.mxu0 0
    %309 = vmatpush1.bf16.msra.mxu0 0
    %310 = vmatprep.subr.bf16.mxu0 0
    %311 = vmatpush1.bf16.msra.mxu0 0
    %312 = vmatprep.subr.bf16.mxu0 0
    %313 = vmatpush1.bf16.msra.mxu0 0
    %314 = vmatprep.subr.bf16.mxu0 0
    %315 = vmatpush1.bf16.msra.mxu0 0
    %316 = vmatprep.subr.bf16.mxu0 0
    %317 = vmatpush1.bf16.msra.mxu0 0
    %318 = vmatprep.subr.bf16.mxu0 0
    %319 = vmatpush1.bf16.msra.mxu0 0
    %320 = vmatprep.subr.bf16.mxu0 0
    %321 = vmatpush1.bf16.msra.mxu0 0
    %322 = vmatprep.mubr.bf16.mxu0 0
    %323 = vmatmul.mubr.bf16.gmra.mrb[0].mxu0 %v288
    %v324 = vpop.f32.mrb[0].mxu0
    %v325 = vadd.f32 %v273, %v324
    %v326 = vpop.f32.mrb[0].mxu0
    %v327 = vpop.f32.mrb[0].mxu0
    %v328 = vpop.f32.mrb[0].mxu0
    %329 = vdwg.mxu0
    %v330 = vunpack.c.l.bf16 %v263
    %v331 = vld [vmem:[%s7] sm:$0x1]
    %v333 = vlaneseq
    %v334 = vshrl.u32 %v333, 7
    %v335 = vsub.s32 0, %v334
    %v336 = vrot.slane %v331, %v335
    %v338 = vmul.f32 %v330, %v336
    %v339 = vsel %vm178, %v338, 0.0
    %340 = vadd.xlane.f32.xlu0 %v339
    %v341 = vpop.xlane.xlu0 %340
    %v342 = vld [vmem:[#allocation2] sm:$0x1]
    %v344 = vlaneseq
    %v345 = vshrl.u32 %v344, 7
    %v346 = vsub.s32 0, %v345
    %v347 = vrot.slane %v342, %v346
    %v349 = vadd.f32 %v341, %v347
    %v350 = vmul.f32 %v262, %v325
    %351 = vadd.xlane.f32.xlu0 %v350
    %v352 = vpop.xlane.xlu0 %351
    %v353 = vadd.f32 %v349, %v352
    %vm354 = vcmask 7168
    %355 = vst.msk [vmem:[%s9] sm:$0xff] %vm354, %v353
    // Predicated region
    $region54: #{tpu_custom_call.1} parent=1 // pred_check
      _
    $region55: #{tpu_custom_call.1} parent=1 // pred_check_branch
      %357 = sbr.rel (0) target = $region57
    $region56: #{tpu_custom_call.1} parent=1 // pred_region
      _
    $region57: #{tpu_custom_call.1} parent=1 // pred_fallthru
      _
    // Predicated region
    $region58: #{tpu_custom_call.1} parent=1 // pred_check
      _
    $region59: #{tpu_custom_call.1} parent=1 // pred_check_branch
      %359 = sbr.rel (0) target = $region61
    $region60: #{tpu_custom_call.1} parent=1 // pred_region
      _
    $region61: #{tpu_custom_call.1} parent=1 // pred_fallthru
      _
    %360 = vsyncpa [#allocation4], 1
    %361 = vsyncpa [#allocation6], 1
    %362 = vsyncpa [#allocation9], 1

</llo_original>
